<compile_context>
chip_gen: v7x
topology: tpu7x:2x2x1
jax: 0.10.0
libtpu: 0.0.40
codegen_flags: <defaults>
</compile_context>

<pallas_src>
import functools

import jax
import jax.numpy as jnp
from jax.experimental import pallas as pl
from jax.experimental.pallas import tpu as pltpu

_LANE = 128
_SINGLE_BUFFER_MIN_BYTES = 8 << 20


@functools.lru_cache(maxsize=1)
def _vmem_budget_bytes():
    """~80% of this generation's per-core VMEM (128 MiB v5e/v6e, 64 MiB/TC v7x),
    leaving headroom for compiler-internal scratch."""
    cap = None
    try:
        cap = getattr(pltpu.get_tpu_info(), "vmem_capacity_bytes", None)
    except Exception:
        cap = None
    if not cap:
        cap = 64 << 20                      # conservative fallback (v7x per-TC)
    return int(int(cap) * 0.8)


def _weight_buffer_count(ep, tn, w_dtype):
    """1 (fetched once, single buffer) for a large grid-constant weight tile;
    otherwise Pallas's default double-buffering (tiny weights don't care,
    revolving N-tiles want the pipeline)."""
    w_bytes = ep * 2 * tn * jnp.dtype(w_dtype).itemsize
    if ep // tn == 1 and w_bytes >= _SINGLE_BUFFER_MIN_BYTES:
        return 1
    return 2


def _plan(E, w_dtype):
    """Static tiling plan: (ep, tn) = lane-padded embed dim, output-column tile."""
    ep = max(_LANE, -(-E // _LANE) * _LANE)
    itemsize = jnp.dtype(w_dtype).itemsize
    budget = _vmem_budget_bytes()
    tn = _LANE
    # Largest output-column tile (multiple of 128, divides ep) whose weight tile
    # fits in ~60% of the VMEM budget (counting its buffering).
    for m in range(ep // _LANE, 0, -1):
        cand = m * _LANE
        if ep % cand:
            continue
        bufs = _weight_buffer_count(ep, cand, w_dtype)
        if ep * 2 * cand * itemsize * bufs <= int(budget * 0.6):
            tn = cand
            break
    return ep, tn


def _choose_tb(B, ep, tn, x_dtype, w_dtype, block_b):
    """Batch-tile rows: as large as the VMEM left after weights allows, capped
    at ~B/2 so v7x's two TensorCores both get at least one tile."""
    row_align = 16 if jnp.dtype(x_dtype).itemsize == 2 else 8
    if B <= row_align:
        return B                            # one full-extent batch block
    itemsize = jnp.dtype(x_dtype).itemsize
    w_item = jnp.dtype(w_dtype).itemsize
    bufs_w = _weight_buffer_count(ep, tn, w_dtype)
    budget = _vmem_budget_bytes()
    resident = bufs_w * (ep * 2 * tn * w_item + 2 * tn * 4)
    rem = max(budget - resident, 2 << 20)
    # per-row bytes: double-buffered x / out tiles + f32 intermediates (h, p, g, x_res, out)
    per_row = 2 * ep * itemsize + 2 * tn * itemsize + 7 * tn * 4
    tb = rem // per_row
    half = -(-B // 2)
    half = -(-half // row_align) * row_align            # >= 2 batch tiles (megacore)
    tb = min(tb, block_b, half, (B // row_align) * row_align)
    tb = max(row_align, (tb // row_align) * row_align)
    return int(tb)


def prepare_highway_params(wp_t, bp, wg_t, bg, *, compute_dtype=None):
    """Build the fused, tile-interleaved [Wp|Wg] weight and [bp|bg] bias ONCE.

    wp_t / wg_t : (E, E) input-major linear weights (torch weight transposed)
    bp / bg     : (E,)   biases
    Doing this at "module init" keeps a weight-sized HBM round trip out of
    every forward call.  Returns (w_cat, b_cat) for `highway_forward`.
    """
    E = wp_t.shape[0]
    dtype = jnp.dtype(compute_dtype) if compute_dtype is not None else wp_t.dtype
    ep, tn = _plan(E, dtype)
    nt = ep // tn

    def pad_w(w):
        w = w.astype(dtype)
        return w if ep == E else jnp.zeros((ep, ep), dtype).at[:E, :E].set(w)

    def pad_b(b):
        b = b.astype(jnp.float32)
        return b if ep == E else jnp.zeros((ep,), jnp.float32).at[:E].set(b)

    wp_p, wg_p = pad_w(wp_t), pad_w(wg_t)
    # Interleave per output-column tile j: block j = [Wp[:, j*tn:(j+1)*tn] | Wg[:, j*tn:(j+1)*tn]].
    w_cat = jnp.stack(
        [wp_p.reshape(ep, nt, tn), wg_p.reshape(ep, nt, tn)], axis=2
    ).reshape(ep, 2 * ep)
    b_cat = jnp.stack(
        [pad_b(bp).reshape(nt, tn), pad_b(bg).reshape(nt, tn)], axis=1
    ).reshape(1, 2 * ep)
    return w_cat, b_cat


def highway_kernel(x_ref, w_ref, b_ref, o_ref):
    """One (column-tile j, batch-tile i) grid step of the fused highway forward.

    x_ref : (TB, EP)    input rows (full padded embed width = matmul K)
    w_ref : (EP, 2*TN)  [Wp_j | Wg_j] interleaved weight tile
    b_ref : (1, 2*TN)   [bp_j | bg_j] bias tile (float32)
    o_ref : (TB, TN)    output columns j*TN .. (j+1)*TN
    """
    tn = o_ref.shape[-1]
    x = x_ref[...]

    # Single MXU matmul per step: (TB, EP) @ (EP, 2*TN), f32 accumulation.
    h = jnp.dot(x, w_ref[...], preferred_element_type=jnp.float32) + b_ref[...]
    p = jnp.maximum(h[:, :tn], 0.0)        # ReLU(proj)     (VPU)
    g = jax.nn.sigmoid(h[:, tn:])          # sigmoid(gate)  (EUP + VPU)

    if x_ref.shape[-1] == tn:              # un-tiled N: residual is the whole row tile
        x_res = x.astype(jnp.float32)
    else:                                  # N-tiled: residual = this tile's columns of x
        col = pl.multiple_of(pl.program_id(0) * tn, 128)
        x_res = x_ref[:, pl.ds(col, tn)].astype(jnp.float32)

    # Highway combine rewritten as x + g*(p - x): one fewer vmul / live vreg.
    o_ref[...] = (x_res + g * (p - x_res)).astype(o_ref.dtype)


@functools.partial(jax.jit, static_argnames=("block_b",))
def highway_forward(x, w_cat, b_cat, *, block_b=1024):
    """Highway forward.  x: (B, E); (w_cat, b_cat) from prepare_highway_params."""
    B, E = x.shape
    ep, tn = _plan(E, w_cat.dtype)
    if w_cat.shape != (ep, 2 * ep) or b_cat.shape != (1, 2 * ep):
        raise ValueError(
            "w_cat/b_cat were not built by prepare_highway_params for "
            f"embed_size={E}: got {w_cat.shape}, {b_cat.shape}")
    nt = ep // tn
    tb = _choose_tb(B, ep, tn, x.dtype, w_cat.dtype, block_b)
    grid_b = -(-B // tb)

    itemsize = jnp.dtype(x.dtype).itemsize
    w_item = jnp.dtype(w_cat.dtype).itemsize
    bufs_w = _weight_buffer_count(ep, tn, w_cat.dtype)

    # No wrapper-side activation copies when E is already lane-aligned; the
    # ragged batch is handled by a partial last grid block (no batch padding).
    x_in = x if ep == E else jnp.pad(x, ((0, 0), (0, ep - E)))

    x_spec = pl.BlockSpec((tb, ep), lambda j, i: (i, 0))
    if bufs_w == 1:
        # Grid-constant, large weight: fetch once, single VMEM buffer.
        w_spec = pl.BlockSpec((ep, 2 * tn), lambda j, i: (0, j),
                              pipeline_mode=pl.Buffered(1))
        b_spec = pl.BlockSpec((1, 2 * tn), lambda j, i: (0, j),
                              pipeline_mode=pl.Buffered(1))
    else:
        w_spec = pl.BlockSpec((ep, 2 * tn), lambda j, i: (0, j))
        b_spec = pl.BlockSpec((1, 2 * tn), lambda j, i: (0, j))
    out_spec = pl.BlockSpec((tb, tn), lambda j, i: (i, j))

    # ---- scheduler hints ----------------------------------------------------
    flops = 2 * B * ep * (2 * ep) + 8 * B * ep
    bytes_accessed = (nt * B * ep * itemsize      # x (re-read once per column tile)
                      + B * ep * itemsize          # out
                      + ep * 2 * ep * w_item       # fused weight, streamed once
                      + 2 * ep * 4)                # bias
    cost = pl.CostEstimate(flops=flops, transcendentals=B * ep,
                           bytes_accessed=bytes_accessed)

    # VMEM: double-buffered x/out tiles, weight/bias buffers, f32 intermediates.
    ws = (2 * tb * ep * itemsize + 2 * tb * tn * itemsize
          + bufs_w * (ep * 2 * tn * w_item + 2 * tn * 4)
          + 9 * tb * tn * 4)
    vmem_limit = min(int(ws * 1.25) + (4 << 20), _vmem_budget_bytes())

    out = pl.pallas_call(
        highway_kernel,
        out_shape=jax.ShapeDtypeStruct((B, ep), x.dtype),
        grid_spec=pltpu.PrefetchScalarGridSpec(
            num_scalar_prefetch=0,
            grid=(nt, grid_b),
            in_specs=[x_spec, w_spec, b_spec],
            out_specs=out_spec,
        ),
        compiler_params=pltpu.CompilerParams(
            dimension_semantics=("parallel", "parallel"),
            vmem_limit_bytes=vmem_limit,
        ),
        cost_estimate=cost,
    )(x_in, w_cat, b_cat)

    return out if ep == E else out[:, :E]


def reference_highway(x, wp_t, bp, wg_t, bg):
    p = jax.nn.relu(x @ wp_t + bp)
    g = jax.nn.sigmoid(x @ wg_t + bg)
    return g * p + (1.0 - g) * x


if __name__ == "__main__":
    key = jax.random.PRNGKey(0)

    def make_params(k, E):
        kwp, kbp, kwg, kbg = jax.random.split(k, 4)
        bound = 1.0 / (E ** 0.5)  # mimic nn.Linear default init U(-1/sqrt(E), 1/sqrt(E))
        wp_t = jax.random.uniform(kwp, (E, E), jnp.float32, -bound, bound)
        bp = jax.random.uniform(kbp, (E,), jnp.float32, -bound, bound)
        wg_t = jax.random.uniform(kwg, (E, E), jnp.float32, -bound, bound)
        bg = jax.random.uniform(kbg, (E,), jnp.float32, -bound, bound)
        return wp_t, bp, wg_t, bg

    # --- primary demo: module-sized shapes (batch of conv outputs) ----------
    B, E = 8, 32
    dropout_rate = 0.3          # eval mode: dropout == identity
    k1, k2, kx1, kx2 = jax.random.split(key, 4)
    wp_t, bp, wg_t, bg = make_params(k1, E)
    x = jax.random.normal(kx1, (B, E), jnp.float32)

    w_cat, b_cat = prepare_highway_params(wp_t, bp, wg_t, bg)   # once, at "module init"
    out = jax.block_until_ready(highway_forward(x, w_cat, b_cat))
    ref = reference_highway(x, wp_t, bp, wg_t, bg)
    assert out.shape == (B, E)
    # MXU f32 accumulation order differs slightly from the XLA reference.
    assert jnp.allclose(out, ref, atol=1e-4, rtol=1e-4), "mismatch vs reference (E=32)"

    # --- second config: lane-aligned E (zero-copy path) + ragged batch ------
    B2, E2 = 20, 128
    wp2, bp2, wg2, bg2 = make_params(k2, E2)
    x2 = jax.random.normal(kx2, (B2, E2), jnp.float32)
    w2, b2 = prepare_highway_params(wp2, bp2, wg2, bg2)
    out2 = jax.block_until_ready(highway_forward(x2, w2, b2))
    ref2 = reference_highway(x2, wp2, bp2, wg2, bg2)
    assert out2.shape == (B2, E2)
    assert jnp.allclose(out2, ref2, atol=1e-4, rtol=1e-4), "mismatch vs reference (E=128)"

    print("KERNEL_OK")
</pallas_src>

<mosaic_0001>
module attributes {stable_mosaic.version = 11 : i64} {
  func.func @highway_kernel(%arg0: i32, %arg1: i32, %arg2: memref<8x128xf32, #tpu.memory_space<vmem>>, %arg3: memref<128x256xf32, #tpu.memory_space<vmem>>, %arg4: memref<1x256xf32, #tpu.memory_space<vmem>>, %arg5: memref<8x128xf32, #tpu.memory_space<vmem>>) attributes {dimension_semantics = [#tpu.dimension_semantics<parallel>, #tpu.dimension_semantics<parallel>], iteration_bounds = array<i64: 1, 1>, scalar_prefetch = 0 : i64, scratch_operands = 0 : i64, tpu.core_type = #tpu.core_type<tc>, window_params = [{transform_indices = @transform_0, window_bounds = array<i64: 8, 128>}, {transform_indices = @transform_1, window_bounds = array<i64: 128, 256>}, {transform_indices = @transform_2, window_bounds = array<i64: 1, 256>}, {transform_indices = @transform_3, window_bounds = array<i64: 8, 128>}]} {
    %c0 = arith.constant 0 : index
    %c0_0 = arith.constant 0 : index
    %0 = vector.load %arg2[%c0, %c0_0] : memref<8x128xf32, #tpu.memory_space<vmem>>, vector<8x128xf32>
    %c0_1 = arith.constant 0 : index
    %c0_2 = arith.constant 0 : index
    %1 = vector.load %arg3[%c0_1, %c0_2] : memref<128x256xf32, #tpu.memory_space<vmem>>, vector<128x256xf32>
    %cst = arith.constant dense<0.000000e+00> : vector<8x256xf32>
    %2 = tpu.matmul %0, %1, %cst {dimension_numbers = #tpu.dot_dimension_numbers<[1], [0], [0], [1], [0, 0, 1, 1], [], []>} : vector<8x128xf32>, vector<128x256xf32>, vector<8x256xf32> -> vector<8x256xf32>
    %c0_3 = arith.constant 0 : index
    %c0_4 = arith.constant 0 : index
    %3 = vector.load %arg4[%c0_3, %c0_4] : memref<1x256xf32, #tpu.memory_space<vmem>>, vector<1x256xf32>
    %4 = vector.broadcast %3 : vector<1x256xf32> to vector<8x256xf32>
    %5 = arith.addf %2, %4 : vector<8x256xf32>
    %6 = vector.extract_strided_slice %5 {offsets = [0, 0], sizes = [8, 128], strides = [1, 1]} : vector<8x256xf32> to vector<8x128xf32>
    %cst_5 = arith.constant 0.000000e+00 : f32
    %7 = vector.broadcast %cst_5 : f32 to vector<8x128xf32>
    %8 = arith.maximumf %6, %7 : vector<8x128xf32>
    %9 = vector.extract_strided_slice %5 {offsets = [0, 128], sizes = [8, 128], strides = [1, 1]} : vector<8x256xf32> to vector<8x128xf32>
    %10 = arith.negf %9 : vector<8x128xf32>
    %11 = math.exp %10 : vector<8x128xf32>
    %cst_6 = arith.constant 1.000000e+00 : f32
    %12 = vector.broadcast %cst_6 : f32 to vector<8x128xf32>
    %13 = arith.addf %12, %11 : vector<8x128xf32>
    %14 = arith.divf %12, %13 : vector<8x128xf32>
    %15 = arith.subf %8, %0 : vector<8x128xf32>
    %16 = arith.mulf %14, %15 : vector<8x128xf32>
    %17 = arith.addf %0, %16 : vector<8x128xf32>
    %c0_7 = arith.constant 0 : index
    %c0_8 = arith.constant 0 : index
    %18 = vector.load %arg5[%c0_7, %c0_8] : memref<8x128xf32, #tpu.memory_space<vmem>>, vector<8x128xf32>
    tpu.vector_store %arg5[%c0_7, %c0_8], %17 {strides = array<i32>} : memref<8x128xf32, #tpu.memory_space<vmem>>, vector<8x128xf32>,
    return
  }
  func.func @transform_0(%arg0: i32, %arg1: i32) -> (i32, i32) {
    %c0_i32 = arith.constant 0 : i32
    %c0_i32_0 = arith.constant 0 : i32
    return %arg1, %c0_i32 : i32, i32
  }
  func.func @transform_1(%arg0: i32, %arg1: i32) -> (i32, i32) {
    %c0_i32 = arith.constant 0 : i32
    %c0_i32_0 = arith.constant 0 : i32
    return %c0_i32, %arg0 : i32, i32
  }
  func.func @transform_2(%arg0: i32, %arg1: i32) -> (i32, i32) {
    %c0_i32 = arith.constant 0 : i32
    %c0_i32_0 = arith.constant 0 : i32
    return %c0_i32, %arg0 : i32, i32
  }
  func.func @transform_3(%arg0: i32, %arg1: i32) -> (i32, i32) {
    %c0_i32 = arith.constant 0 : i32
    return %arg1, %arg0 : i32, i32
  }
}

</mosaic_0001>

<llo_original>
// kernel: highway_forward.1
$region0: #{highway_forward.1}
  #allocation0 [shape = 'u32[]', space=smem, size = 0x4, offset = 0x4, fixed_abs, tag = 'smem constant byte address 0x4 - core index']
  #allocation1 [shape = 'u32[144,128]{1,0:T(1,128)}', space=vmem, size = 0x12000, scoped, tag = 'internal scratch']
  %s0 = inlined_call_operand.vmem [shape: f32[8,128], index: 0, kind: input, shape index: {}]
  %s1 = inlined_call_operand.hbm [shape: f32[128,256], index: 1, kind: input, shape index: {}]
  %s2 = inlined_call_operand.vmem [shape: f32[1,256], index: 2, kind: input, shape index: {}]
  %s3 = inlined_call_operand.hbm [shape: f32[8,128], index: 3, kind: output, shape index: {}]
  %s4 = sld [smem:[#allocation0]]
  $region26: #{highway_forward.1} parent=0
    _
  %s6 = ssub.s32 1, %s4
  %s7 = scalar_select 0, %s6, %s4
  $region1: #{highway_forward.1} parent=0
    #allocation2 [shape = 'u8[131072]{0}', space=vmem, size = 0x20000, scoped, tag = 'input window, operand 1, single buffered']
    #allocation3 [shape = 's32[1]{0}', space=sflag, size = 0x4, scoped, tag = 'scoped memory for highway_forward.1']
    #allocation4 [shape = 's32[1]{0}', space=sflag, size = 0x4, scoped, tag = 'scoped memory for highway_forward.1']
    #allocation5 [shape = 'u8[4096]{0}', space=vmem, size = 0x1000, scoped, tag = 'output window, operand 0, single buffered']
    %8 = vsyncpa [#allocation3], 0
    %9 = vsyncpa [#allocation4], 0
    // Predicated region
    $region2: #{highway_forward.1} parent=1 // pred_check
      _
    $region3: #{highway_forward.1} parent=1 // pred_check_branch
      %11 = sbr.rel (0) target = $region5
    $region4: #{highway_forward.1} parent=1 // pred_region
      _
    $region5: #{highway_forward.1} parent=1 // pred_fallthru
      _
    // Predicated region
    $region6: #{highway_forward.1} parent=1 // pred_check
      _
    $region7: #{highway_forward.1} parent=1 // pred_check_branch
      %13 = sbr.rel (0) target = $region9
    $region8: #{highway_forward.1} parent=1 // pred_region
      %s15 = ssub.s32 4096, 4096
      %16 = vsyncadd [#allocation3], %s15
      %s17 = sshll.u32 [#allocation2], 4
      %s18 = int_to_ptr.vmem [resolvable:$true] %s17
      %23 = dma.hbm_to_vmem [thread:$0]  %s1, 4096, %s18, [#allocation3], 256, 256, 16
    $region9: #{highway_forward.1} parent=1 // pred_fallthru
      _
    // Predicated region
    $region10: #{highway_forward.1} parent=1 // pred_check
      _
    $region11: #{highway_forward.1} parent=1 // pred_check_branch
      %25 = sbr.rel (0) target = $region13
    $region12: #{highway_forward.1} parent=1 // pred_region
      _
    $region13: #{highway_forward.1} parent=1 // pred_fallthru
      _
    // Predicated region
    $region14: #{highway_forward.1} parent=1 // pred_check
      _
    $region15: #{highway_forward.1} parent=1 // pred_check_branch
      %27 = sbr.rel (0) target = $region17
    $region16: #{highway_forward.1} parent=1 // pred_region
      %28 = dma.done [#allocation3], 4096
    $region17: #{highway_forward.1} parent=1 // pred_fallthru
      _
    %v29 = vld [vmem:[%s0] sm:$0xff]
    %v30 = vld [vmem:[#allocation2] sm:$0xff]
    %v31 = vld [vmem:[#allocation2 + $0x8] sm:$0xff]
    %v32 = vld [vmem:[#allocation2 + $0x10] sm:$0xff]
    %v33 = vld [vmem:[#allocation2 + $0x18] sm:$0xff]
    %v34 = vld [vmem:[#allocation2 + $0x20] sm:$0xff]
    %v35 = vld [vmem:[#allocation2 + $0x28] sm:$0xff]
    %v36 = vld [vmem:[#allocation2 + $0x30] sm:$0xff]
    %v37 = vld [vmem:[#allocation2 + $0x38] sm:$0xff]
    %v38 = vld [vmem:[#allocation2 + $0x40] sm:$0xff]
    %v39 = vld [vmem:[#allocation2 + $0x48] sm:$0xff]
    %v40 = vld [vmem:[#allocation2 + $0x50] sm:$0xff]
    %v41 = vld [vmem:[#allocation2 + $0x58] sm:$0xff]
    %v42 = vld [vmem:[#allocation2 + $0x60] sm:$0xff]
    %v43 = vld [vmem:[#allocation2 + $0x68] sm:$0xff]
    %v44 = vld [vmem:[#allocation2 + $0x70] sm:$0xff]
    %v45 = vld [vmem:[#allocation2 + $0x78] sm:$0xff]
    %v46 = vld [vmem:[#allocation2 + $0x80] sm:$0xff]
    %v47 = vld [vmem:[#allocation2 + $0x88] sm:$0xff]
    %v48 = vld [vmem:[#allocation2 + $0x90] sm:$0xff]
    %v49 = vld [vmem:[#allocation2 + $0x98] sm:$0xff]
    %v50 = vld [vmem:[#allocation2 + $0xa0] sm:$0xff]
    %v51 = vld [vmem:[#allocation2 + $0xa8] sm:$0xff]
    %v52 = vld [vmem:[#allocation2 + $0xb0] sm:$0xff]
    %v53 = vld [vmem:[#allocation2 + $0xb8] sm:$0xff]
    %v54 = vld [vmem:[#allocation2 + $0xc0] sm:$0xff]
    %v55 = vld [vmem:[#allocation2 + $0xc8] sm:$0xff]
    %v56 = vld [vmem:[#allocation2 + $0xd0] sm:$0xff]
    %v57 = vld [vmem:[#allocation2 + $0xd8] sm:$0xff]
    %v58 = vld [vmem:[#allocation2 + $0xe0] sm:$0xff]
    %v59 = vld [vmem:[#allocation2 + $0xe8] sm:$0xff]
    %v60 = vld [vmem:[#allocation2 + $0xf0] sm:$0xff]
    %v61 = vld [vmem:[#allocation2 + $0xf8] sm:$0xff]
    %v62 = vld [vmem:[%s2] sm:$0x3]
    %v64 = vlaneseq
    %v65 = vshrl.u32 %v64, 7
    %v66 = vsub.s32 0, %v65
    %v67 = vrot.slane %v62, %v66
    %v68 = vlaneseq
    %v69 = vshrl.u32 %v68, 7
    %v70 = vsub.s32 1, %v69
    %v71 = vrot.slane %v62, %v70
    %74 = vmatprep.subr.mxu0 %v31
    %75 = vmatpush1.msra.mxu0 %v30
    %76 = vmatprep.subr.mxu0 %v33
    %77 = vmatpush1.msra.mxu0 %v32
    %78 = vmatprep.subr.mxu0 %v35
    %79 = vmatpush1.msra.mxu0 %v34
    %80 = vmatprep.subr.mxu0 %v37
    %81 = vmatpush1.msra.mxu0 %v36
    %82 = vmatprep.subr.mxu0 %v39
    %83 = vmatpush1.msra.mxu0 %v38
    %84 = vmatprep.subr.mxu0 %v41
    %85 = vmatpush1.msra.mxu0 %v40
    %86 = vmatprep.subr.mxu0 %v43
    %87 = vmatpush1.msra.mxu0 %v42
    %88 = vmatprep.subr.mxu0 %v45
    %89 = vmatpush1.msra.mxu0 %v44
    %90 = vmatprep.subr.mxu0 %v47
    %91 = vmatpush1.msra.mxu0 %v46
    %92 = vmatprep.subr.mxu0 %v49
    %93 = vmatpush1.msra.mxu0 %v48
    %94 = vmatprep.subr.mxu0 %v51
    %95 = vmatpush1.msra.mxu0 %v50
    %96 = vmatprep.subr.mxu0 %v53
    %97 = vmatpush1.msra.mxu0 %v52
    %98 = vmatprep.subr.mxu0 %v55
    %99 = vmatpush1.msra.mxu0 %v54
    %100 = vmatprep.subr.mxu0 %v57
    %101 = vmatpush1.msra.mxu0 %v56
    %102 = vmatprep.subr.mxu0 %v59
    %103 = vmatpush1.msra.mxu0 %v58
    %104 = vmatprep.subr.mxu0 %v61
    %105 = vmatpush1.msra.mxu0 %v60
    %106 = vmatprep.subr.mxu0 0.0
    %107 = vmatpush1.msra.mxu0 0.0
    %108 = vmatprep.subr.mxu0 0.0
    %109 = vmatpush1.msra.mxu0 0.0
    %110 = vmatprep.subr.mxu0 0.0
    %111 = vmatpush1.msra.mxu0 0.0
    %112 = vmatprep.subr.mxu0 0.0
    %113 = vmatpush1.msra.mxu0 0.0
    %114 = vmatprep.subr.mxu0 0.0
    %115 = vmatpush1.msra.mxu0 0.0
    %116 = vmatprep.subr.mxu0 0.0
    %117 = vmatpush1.msra.mxu0 0.0
    %118 = vmatprep.subr.mxu0 0.0
    %119 = vmatpush1.msra.mxu0 0.0
    %120 = vmatprep.subr.mxu0 0.0
    %121 = vmatpush1.msra.mxu0 0.0
    %122 = vmatprep.subr.mxu0 0.0
    %123 = vmatpush1.msra.mxu0 0.0
    %124 = vmatprep.subr.mxu0 0.0
    %125 = vmatpush1.msra.mxu0 0.0
    %126 = vmatprep.subr.mxu0 0.0
    %127 = vmatpush1.msra.mxu0 0.0
    %128 = vmatprep.subr.mxu0 0.0
    %129 = vmatpush1.msra.mxu0 0.0
    %130 = vmatprep.subr.mxu0 0.0
    %131 = vmatpush1.msra.mxu0 0.0
    %132 = vmatprep.subr.mxu0 0.0
    %133 = vmatpush1.msra.mxu0 0.0
    %134 = vmatprep.subr.mxu0 0.0
    %135 = vmatpush1.msra.mxu0 0.0
    %136 = vmatprep.subr.mxu0 0.0
    %137 = vmatpush1.msra.mxu0 0.0
    %138 = vmatprep.mubr.f32.mxu0 0.0
    %139 = vmatmul.mubr.f32.gmra.mrb[0].mxu0 %v29
    %v140 = vpop.f32.mrb[0].mxu0
    %v141 = vadd.f32 %v67, %v140
    %v142 = vpop.f32.mrb[0].mxu0
    %v143 = vadd.f32 %v71, %v142
    %144 = vdwg.mxu0
    %v145 = vmax.f32 %v141, 0.0
    %v146 = vxor.u32 %v143, 2147483648
    %v147 = vmul.f32 %v146, 1.442695
    %v148 = vpow.pop %v147
    %v149 = vadd.f32 %v148, 1.0
    %v150 = vrcp.pop %v149
    %v151 = vmul.f32 1.0, %v150
    %v152 = vsub.f32 %v145, %v29
    %v153 = vmul.f32 %v151, %v152
    %v154 = vadd.f32 %v29, %v153
    %155 = vst [vmem:[#allocation5] sm:$0xff] %v154
    // Predicated region
    $region18: #{highway_forward.1} parent=1 // pred_check
      _
    $region19: #{highway_forward.1} parent=1 // pred_check_branch
      %157 = sbr.rel (0) target = $region21
    $region20: #{highway_forward.1} parent=1 // pred_region
      %s159 = ssub.s32 128, 128
      %160 = vsyncadd [#allocation4], %s159
      %s162 = sshll.u32 [#allocation5], 4
      %s163 = int_to_ptr.vmem [resolvable:$true] %s162
      %165 = dma.vmem_to_hbm [thread:$0]  %s163, 128, %s3, [#allocation4]
    $region21: #{highway_forward.1} parent=1 // pred_fallthru
      _
    // Predicated region
    $region22: #{highway_forward.1} parent=1 // pred_check
      _
    $region23: #{highway_forward.1} parent=1 // pred_check_branch
      %167 = sbr.rel (0) target = $region25
    $region24: #{highway_forward.1} parent=1 // pred_region
      %168 = dma.done [#allocation4], 128
    $region25: #{highway_forward.1} parent=1 // pred_fallthru
      _
    %169 = vsyncpa [#allocation3], 1
    %170 = vsyncpa [#allocation4], 1

</llo_original>
